<compile_context>
chip_gen: v6e
topology: v6e:2x2x1
jax: 0.10.0
libtpu: 0.0.40
codegen_flags: <defaults>
</compile_context>

<pallas_src>
import functools

import numpy as np
import jax
import jax.numpy as jnp
from jax import lax
from jax.experimental import pallas as pl
from jax.experimental.pallas import tpu as pltpu

RESET_FRAME = 5   # self.reset_frame
_UNROLL = 4       # manual unroll factor for the scalar recurrence


def _pick_time_tile(T, candidates):
    """Largest time tile from `candidates` that evenly divides T (else full T)."""
    for tt in candidates:
        if T % tt == 0:
            return tt
    return T


# ------------------------------------------------------------------
# Kernel 1: VAD proxy  ->  uu = 1 - sigmoid(logit) = sigmoid(-logit)
#           natural-layout feats in, lane-dense (B, T) out
# ------------------------------------------------------------------
def _vad_uu_kernel(feats_ref, w_ref, b_ref, uu_ref):
    x = feats_ref[...]                                        # (B, tT, D)
    w = w_ref[...]                                            # (1, D)
    logits = jnp.sum(x * w[None, :, :], axis=-1) + b_ref[0, 0]   # (B, tT)
    uu_ref[...] = jax.nn.sigmoid(-logits)                     # single EUP transcendental


def vad_uu(feats, w_vad, b_vad):
    B, T, D = feats.shape
    tT = _pick_time_tile(T, (2048, 1024, 512, 256, 128))
    return pl.pallas_call(
        _vad_uu_kernel,
        out_shape=jax.ShapeDtypeStruct((B, T), jnp.float32),
        grid=(T // tT,),
        in_specs=[
            pl.BlockSpec((B, tT, D), lambda i: (0, i, 0)),    # no wrapper transpose
            pl.BlockSpec((1, D), lambda i: (0, 0)),
            pl.BlockSpec((1, 1), lambda i: (0, 0)),
        ],
        out_specs=pl.BlockSpec((B, tT), lambda i: (0, i)),
        # independent time tiles -> sharded across TensorCores on v7x megacore
        compiler_params=pltpu.CompilerParams(dimension_semantics=("parallel",)),
    )(feats, w_vad, b_vad)


# ------------------------------------------------------------------
# Kernel 2: get_silence() scalar recurrence (phase A) + vectorized
#           nn.Linear(3, E) over (tT, E) tiles (phase B)
# ------------------------------------------------------------------
def _silence_linear_kernel(len_ref, uu_ref, w_ref, b_ref, o_ref,
                           et_col_ref, ul_col_ref, fstate_ref, istate_ref,
                           *, T, tT):
    b = pl.program_id(0)          # batch index       (outer, "arbitrary")
    i = pl.program_id(1)          # time-tile index   (inner, "arbitrary")

    # Initialize the carried module state (et / pre / cnt / ul) once.
    @pl.when(jnp.logical_and(b == 0, i == 0))
    def _():
        fstate_ref[0] = jnp.float32(0.0)   # et
        fstate_ref[1] = jnp.float32(0.0)   # pre
        istate_ref[0] = jnp.int32(0)       # cnt
        istate_ref[1] = jnp.int32(0)       # ul

    L = jnp.clip(len_ref[b], 0, T)         # clamp: no OOB uu reads / output writes
    t_start = i * tT
    n = jnp.clip(L - t_start, 0, tT)       # real frames in this tile
    base = b * T + t_start                 # flat uu index of this tile's frame 0

    # ---- phase A: purely scalar recurrence; per frame it emits only the two
    #      counters into tiny (tT, 1) VMEM columns (no Linear work in the loop). ----
    def step(t_local, s):
        et, cnt, ul, pre = s
        uu = uu_ref[base + t_local]                     # SMEM scalar load
        et = et + uu
        gt = uu > 0.5
        cnt = jnp.where(gt, 0, cnt)
        ul = jnp.where(gt, 0, ul + 1)
        inc = jnp.logical_and(uu < 0.5, jnp.logical_or(pre >= 0.5, cnt > 0))
        cnt = cnt + inc.astype(jnp.int32)
        reset = cnt > RESET_FRAME
        et = jnp.where(reset, 0.0, et)
        cnt = jnp.where(reset, 0, cnt)
        et_col_ref[pl.ds(t_local, 1), :] = jnp.full((1, 1), et, jnp.float32)
        ul_col_ref[pl.ds(t_local, 1), :] = jnp.full(
            (1, 1), ul.astype(jnp.float32), jnp.float32)
        return (et, cnt, ul, uu)                        # pre <- uu

    state = (fstate_ref[0], istate_ref[0], istate_ref[1], fstate_ref[1])

    def unrolled(k, s):                                 # manual x4 unroll
        t0 = k * _UNROLL
        for j in range(_UNROLL):
            s = step(t0 + j, s)
        return s

    n_main = (n // _UNROLL) * _UNROLL
    state = lax.fori_loop(0, n // _UNROLL, unrolled, state)
    state = lax.fori_loop(n_main, n, step, state)       # tail
    et, cnt, ul, pre = state
    fstate_ref[0] = et
    fstate_ref[1] = pre
    istate_ref[0] = cnt
    istate_ref[1] = ul

    # ---- phase B: vectorized Linear(3, E) over the whole tile, dense stores. ----
    w_sil = w_ref[0:1, :]                               # (1, E)
    w_ul = w_ref[1:2, :]
    w_dl = w_ref[2:3, :]
    bias = b_ref[...]                                   # (1, E)

    idx = lax.broadcasted_iota(jnp.int32, (tT, 1), 0) + t_start   # global frame idx
    valid = idx < L                                     # (tT, 1)
    # Padded frames: x = [0, 0, 0]  ->  r = bias (matches torch zero-padding).
    et_col = jnp.where(valid, et_col_ref[...], 0.0)
    ul_col = jnp.where(valid, ul_col_ref[...], 0.0)
    dl_col = jnp.where(valid, idx.astype(jnp.float32), 0.0)

    out = et_col * w_sil + ul_col * w_ul + dl_col * w_dl + bias    # (tT, E) VPU FMAs
    o_ref[...] = out.astype(o_ref.dtype)                # dense (tT, E) store


def silence_linear(uu, lengths, w_lin_t, b_lin):
    B, T = uu.shape
    E = w_lin_t.shape[1]
    tT = _pick_time_tile(T, (512, 256, 128))
    kern = functools.partial(_silence_linear_kernel, T=T, tT=tT)
    return pl.pallas_call(
        kern,
        out_shape=jax.ShapeDtypeStruct((B, T, E), jnp.float32),
        grid=(B, T // tT),
        in_specs=[
            pl.BlockSpec(memory_space=pltpu.MemorySpace.SMEM),   # input_lengths (B,)
            pl.BlockSpec(memory_space=pltpu.MemorySpace.SMEM),   # uu flat (B*T,)
            pl.BlockSpec((3, E), lambda b, i: (0, 0)),            # W^T, resident
            pl.BlockSpec((1, E), lambda b, i: (0, 0)),            # bias, resident
        ],
        out_specs=pl.BlockSpec((None, tT, E), lambda b, i: (b, i, 0)),
        scratch_shapes=[
            pltpu.VMEM((tT, 1), jnp.float32),    # et column (phase A -> phase B)
            pltpu.VMEM((tT, 1), jnp.float32),    # ul column
            pltpu.SMEM((2,), jnp.float32),       # carried [et, pre]
            pltpu.SMEM((2,), jnp.int32),         # carried [cnt, ul]
        ],
        # state chains batch-outer / time-inner -> both axes sequential
        compiler_params=pltpu.CompilerParams(
            dimension_semantics=("arbitrary", "arbitrary")),
    )(lengths.astype(jnp.int32), uu.reshape(B * T), w_lin_t, b_lin)


# ------------------------------------------------------------------
# Wrapper == TimingEncoder.forward (is_use_silence=True, is_use_n_word=False)
# ------------------------------------------------------------------
def timing_encoder_forward(feats, input_lengths, params):
    """feats: (B, T, D) acoustic features -> r_t: (B, T, encoding_dim)."""
    uu = vad_uu(feats, params["w_vad"], params["b_vad"])              # (B, T)
    return silence_linear(uu, input_lengths, params["w_lin_t"], params["b_lin"])


# ------------------------------------------------------------------
# Pure numpy reference (mirrors the PyTorch forward exactly, float64)
# ------------------------------------------------------------------
def reference_forward(feats, lengths, w_vad, b_vad, w_lin_t, b_lin):
    feats64 = np.asarray(feats, np.float64)
    B, T, D = feats64.shape
    w = np.asarray(w_vad, np.float64).reshape(D)
    b = float(np.asarray(b_vad, np.float64).reshape(()))
    logits = feats64 @ w + b                                   # (B, T)
    probs = 1.0 / (1.0 + np.exp(-logits))
    sil = np.zeros((B, T))
    ulm = np.zeros((B, T))
    dlm = np.zeros((B, T))
    et, cnt, ul, pre = 0.0, 0, 0, 0.0
    for bi in range(B):
        L = int(lengths[bi])
        for t in range(L):
            uu = 1.0 - probs[bi, t]
            et += uu
            if uu > 0.5:
                cnt = 0
                ul = 0
            else:
                ul += 1
            if pre >= 0.5 and uu < 0.5:
                cnt += 1
            elif uu < 0.5 and cnt > 0:
                cnt += 1
            if cnt > RESET_FRAME:
                et = 0.0
                cnt = 0
            sil[bi, t] = et
            ulm[bi, t] = ul
            dlm[bi, t] = t
            pre = uu
    x = np.stack([sil, ulm, dlm], axis=-1)                     # (B, T, 3)
    out = x @ np.asarray(w_lin_t, np.float64) + np.asarray(b_lin, np.float64)
    return out                                                 # (B, T, E)


if __name__ == "__main__":
    # batch, max seq len (lane-dense), vad_input_dim, encoding_dim (lane-dense)
    B, T, D, E = 2, 128, 8, 128

    key = jax.random.PRNGKey(0)
    k_feats, k_wvad, k_wlin, k_blin = jax.random.split(key, 4)

    feats = jax.random.normal(k_feats, (B, T, D), dtype=jnp.float32)
    input_lengths = jnp.array([T, T - 29], dtype=jnp.int32)   # max == T, batch 1 padded

    params = {
        # VAD proxy params (stand-in for the pretrained VADCNNAE)
        "w_vad": jax.random.normal(k_wvad, (1, D), dtype=jnp.float32) * 0.5,
        "b_vad": jnp.zeros((1, 1), dtype=jnp.float32),
        # nn.Linear(input_dim=3, encoding_dim=E): stored transposed (3, E)
        "w_lin_t": jax.random.normal(k_wlin, (3, E), dtype=jnp.float32) * 0.1,
        "b_lin": jax.random.normal(k_blin, (1, E), dtype=jnp.float32) * 0.1,
    }

    r_t = timing_encoder_forward(feats, input_lengths, params)
    r_t = jax.block_until_ready(r_t)

    ref = reference_forward(
        np.asarray(feats), np.asarray(input_lengths),
        np.asarray(params["w_vad"]), np.asarray(params["b_vad"]),
        np.asarray(params["w_lin_t"]), np.asarray(params["b_lin"]),
    )

    if not np.allclose(np.asarray(r_t, np.float64), ref, rtol=5e-3, atol=5e-3):
        diff = np.max(np.abs(np.asarray(r_t, np.float64) - ref))
        raise AssertionError(f"Pallas output mismatch vs reference, max abs diff = {diff}")

    print("KERNEL_OK")
</pallas_src>

<mosaic_0001>
module attributes {stable_mosaic.version = 11 : i64} {
  func.func @_vad_uu_kernel(%arg0: i32, %arg1: memref<2x128x8xf32, #tpu.memory_space<vmem>>, %arg2: memref<1x8xf32, #tpu.memory_space<vmem>>, %arg3: memref<1x1xf32, #tpu.memory_space<vmem>>, %arg4: memref<2x128xf32, #tpu.memory_space<vmem>>) attributes {dimension_semantics = [#tpu.dimension_semantics<parallel>], iteration_bounds = array<i64: 1>, scalar_prefetch = 0 : i64, scratch_operands = 0 : i64, tpu.core_type = #tpu.core_type<tc>, window_params = [{transform_indices = @transform_0, window_bounds = array<i64: 2, 128, 8>}, {pipeline_mode = #tpu.pipeline_mode<synchronous>, transform_indices = @transform_1, window_bounds = array<i64: 1, 8>}, {pipeline_mode = #tpu.pipeline_mode<synchronous>, transform_indices = @transform_2, window_bounds = array<i64: 1, 1>}, {transform_indices = @transform_3, window_bounds = array<i64: 2, 128>}]} {
    %c0 = arith.constant 0 : index
    %c0_0 = arith.constant 0 : index
    %c0_1 = arith.constant 0 : index
    %0 = vector.load %arg1[%c0, %c0_0, %c0_1] : memref<2x128x8xf32, #tpu.memory_space<vmem>>, vector<2x128x8xf32>
    %c0_2 = arith.constant 0 : index
    %c0_3 = arith.constant 0 : index
    %1 = vector.load %arg2[%c0_2, %c0_3] : memref<1x8xf32, #tpu.memory_space<vmem>>, vector<1x8xf32>
    %2 = vector.shape_cast %1 : vector<1x8xf32> to vector<1x1x8xf32>
    %3 = vector.broadcast %2 : vector<1x1x8xf32> to vector<2x128x8xf32>
    %4 = arith.mulf %0, %3 : vector<2x128x8xf32>
    %cst = arith.constant dense<0.000000e+00> : vector<2x128xf32>
    %5 = vector.multi_reduction <add>, %4, %cst [2] : vector<2x128x8xf32> to vector<2x128xf32>
    %c0_4 = arith.constant 0 : index
    %c0_5 = arith.constant 0 : index
    %6 = vector.load %arg3[%c0_4, %c0_5] : memref<1x1xf32, #tpu.memory_space<vmem>>, vector<1x1xf32>
    %7 = vector.extract %6[0, 0] : f32 from vector<1x1xf32>
    %8 = vector.broadcast %7 : f32 to vector<2x128xf32>
    %9 = arith.addf %5, %8 : vector<2x128xf32>
    %cst_6 = arith.constant 0.000000e+00 : f32
    %10 = vector.broadcast %cst_6 : f32 to vector<2x128xf32>
    %11 = arith.subf %10, %9 : vector<2x128xf32>
    %12 = arith.negf %11 : vector<2x128xf32>
    %13 = math.exp %12 : vector<2x128xf32>
    %cst_7 = arith.constant 1.000000e+00 : f32
    %14 = vector.broadcast %cst_7 : f32 to vector<2x128xf32>
    %15 = arith.addf %14, %13 : vector<2x128xf32>
    %16 = arith.divf %14, %15 : vector<2x128xf32>
    %c0_8 = arith.constant 0 : index
    %c0_9 = arith.constant 0 : index
    %17 = vector.load %arg4[%c0_8, %c0_9] : memref<2x128xf32, #tpu.memory_space<vmem>>, vector<2x128xf32>
    tpu.vector_store %arg4[%c0_8, %c0_9], %16 {strides = array<i32>} : memref<2x128xf32, #tpu.memory_space<vmem>>, vector<2x128xf32>,
    return
  }
  func.func @transform_0(%arg0: i32) -> (i32, i32, i32) {
    %c0_i32 = arith.constant 0 : i32
    %c0_i32_0 = arith.constant 0 : i32
    %c0_i32_1 = arith.constant 0 : i32
    return %c0_i32, %arg0, %c0_i32_0 : i32, i32, i32
  }
  func.func @transform_1(%arg0: i32) -> (i32, i32) {
    %c0_i32 = arith.constant 0 : i32
    %c0_i32_0 = arith.constant 0 : i32
    %c0_i32_1 = arith.constant 0 : i32
    return %c0_i32, %c0_i32_0 : i32, i32
  }
  func.func @transform_2(%arg0: i32) -> (i32, i32) {
    %c0_i32 = arith.constant 0 : i32
    %c0_i32_0 = arith.constant 0 : i32
    %c0_i32_1 = arith.constant 0 : i32
    return %c0_i32, %c0_i32_0 : i32, i32
  }
  func.func @transform_3(%arg0: i32) -> (i32, i32) {
    %c0_i32 = arith.constant 0 : i32
    %c0_i32_0 = arith.constant 0 : i32
    return %c0_i32, %arg0 : i32, i32
  }
}

</mosaic_0001>

<llo_original>
// kernel: tpu_custom_call.1
$region0: #{tpu_custom_call.1}
  #allocation0 [shape = 'u32[]', space=smem, size = 0x4, offset = 0x4, fixed_abs, tag = 'smem constant byte address 0x4 - core index']
  #allocation1 [shape = 'u32[144,128]{1,0:T(1,128)}', space=vmem, size = 0x12000, scoped, tag = 'internal scratch']
  #allocation2 [shape = 'f32[1,1]{1,0:T(1,128)S(1)}', space=vmem, size = 0x200, scoped, tag = 'scoped memory for tpu_custom_call.1']
  %s0 = inlined_call_operand.vmem [shape: f32[2,128,8], index: 0, kind: input, shape index: {}]
  %s1 = inlined_call_operand.vmem [shape: f32[1,8], index: 1, kind: input, shape index: {}]
  %s2 = inlined_call_operand.<no memory space> [shape: f32[1,1], index: 2, kind: input, shape index: {}]
  %s3 = inlined_call_operand.hbm [shape: f32[2,128], index: 3, kind: output, shape index: {}]
  %s4 = sld [smem:[#allocation0]]
  $region22: #{tpu_custom_call.1} parent=0
    _
  %s6 = ssub.s32 1, %s4
  %s7 = scalar_select 0, %s6, %s4
  %v8 = vstv %s2
  %9 = vst [vmem:[#allocation2] sm:$0x1] %v8
  $region1: #{tpu_custom_call.1} parent=0
    #allocation3 [shape = 'u8[1024]{0}', space=vmem, size = 0x400, scoped, tag = 'output window, operand 0, single buffered']
    #allocation4 [shape = 's32[1]{0}', space=sflag, size = 0x4, scoped, tag = 'scoped memory for tpu_custom_call.1']
    %10 = vsyncpa [#allocation4], 0
    // Predicated region
    $region2: #{tpu_custom_call.1} parent=1 // pred_check
      _
    $region3: #{tpu_custom_call.1} parent=1 // pred_check_branch
      %12 = sbr.rel (0) target = $region5
    $region4: #{tpu_custom_call.1} parent=1 // pred_region
      _
    $region5: #{tpu_custom_call.1} parent=1 // pred_fallthru
      _
    // Predicated region
    $region6: #{tpu_custom_call.1} parent=1 // pred_check
      _
    $region7: #{tpu_custom_call.1} parent=1 // pred_check_branch
      %14 = sbr.rel (0) target = $region9
    $region8: #{tpu_custom_call.1} parent=1 // pred_region
      _
    $region9: #{tpu_custom_call.1} parent=1 // pred_fallthru
      _
    // Predicated region
    $region10: #{tpu_custom_call.1} parent=1 // pred_check
      _
    $region11: #{tpu_custom_call.1} parent=1 // pred_check_branch
      %16 = sbr.rel (0) target = $region13
    $region12: #{tpu_custom_call.1} parent=1 // pred_region
      _
    $region13: #{tpu_custom_call.1} parent=1 // pred_fallthru
      _
    %v17 = vld [vmem:[%s0] sm:$0xff]
    %v18 = vld [vmem:[%s0 + $0x8] sm:$0xff]
    %v19 = vld [vmem:[%s0 + $0x10] sm:$0xff]
    %v20 = vld [vmem:[%s0 + $0x18] sm:$0xff]
    %v21 = vld [vmem:[%s0 + $0x20] sm:$0xff]
    %v22 = vld [vmem:[%s0 + $0x28] sm:$0xff]
    %v23 = vld [vmem:[%s0 + $0x30] sm:$0xff]
    %v24 = vld [vmem:[%s0 + $0x38] sm:$0xff]
    %v25 = vld [vmem:[%s0 + $0x40] sm:$0xff]
    %v26 = vld [vmem:[%s0 + $0x48] sm:$0xff]
    %v27 = vld [vmem:[%s0 + $0x50] sm:$0xff]
    %v28 = vld [vmem:[%s0 + $0x58] sm:$0xff]
    %v29 = vld [vmem:[%s0 + $0x60] sm:$0xff]
    %v30 = vld [vmem:[%s0 + $0x68] sm:$0xff]
    %v31 = vld [vmem:[%s0 + $0x70] sm:$0xff]
    %v32 = vld [vmem:[%s0 + $0x78] sm:$0xff]
    %v33 = vld [vmem:[%s0 + $0x80] sm:$0xff]
    %v34 = vld [vmem:[%s0 + $0x88] sm:$0xff]
    %v35 = vld [vmem:[%s0 + $0x90] sm:$0xff]
    %v36 = vld [vmem:[%s0 + $0x98] sm:$0xff]
    %v37 = vld [vmem:[%s0 + $0xa0] sm:$0xff]
    %v38 = vld [vmem:[%s0 + $0xa8] sm:$0xff]
    %v39 = vld [vmem:[%s0 + $0xb0] sm:$0xff]
    %v40 = vld [vmem:[%s0 + $0xb8] sm:$0xff]
    %v41 = vld [vmem:[%s0 + $0xc0] sm:$0xff]
    %v42 = vld [vmem:[%s0 + $0xc8] sm:$0xff]
    %v43 = vld [vmem:[%s0 + $0xd0] sm:$0xff]
    %v44 = vld [vmem:[%s0 + $0xd8] sm:$0xff]
    %v45 = vld [vmem:[%s0 + $0xe0] sm:$0xff]
    %v46 = vld [vmem:[%s0 + $0xe8] sm:$0xff]
    %v47 = vld [vmem:[%s0 + $0xf0] sm:$0xff]
    %v48 = vld [vmem:[%s0 + $0xf8] sm:$0xff]
    %v49 = vld [vmem:[%s1] sm:$0x1]
    %v51 = vlaneseq
    %v52 = vshrl.u32 %v51, 7
    %v53 = vsub.s32 0, %v52
    %v54 = vrot.slane %v49, %v53
    %v56 = vmul.f32 %v17, %v54
    %v57 = vmul.f32 %v18, %v54
    %v58 = vmul.f32 %v19, %v54
    %v59 = vmul.f32 %v20, %v54
    %v60 = vmul.f32 %v21, %v54
    %v61 = vmul.f32 %v22, %v54
    %v62 = vmul.f32 %v23, %v54
    %v63 = vmul.f32 %v24, %v54
    %v64 = vmul.f32 %v25, %v54
    %v65 = vmul.f32 %v26, %v54
    %v66 = vmul.f32 %v27, %v54
    %v67 = vmul.f32 %v28, %v54
    %v68 = vmul.f32 %v29, %v54
    %v69 = vmul.f32 %v30, %v54
    %v70 = vmul.f32 %v31, %v54
    %v71 = vmul.f32 %v32, %v54
    %v72 = vmul.f32 %v33, %v54
    %v73 = vmul.f32 %v34, %v54
    %v74 = vmul.f32 %v35, %v54
    %v75 = vmul.f32 %v36, %v54
    %v76 = vmul.f32 %v37, %v54
    %v77 = vmul.f32 %v38, %v54
    %v78 = vmul.f32 %v39, %v54
    %v79 = vmul.f32 %v40, %v54
    %v80 = vmul.f32 %v41, %v54
    %v81 = vmul.f32 %v42, %v54
    %v82 = vmul.f32 %v43, %v54
    %v83 = vmul.f32 %v44, %v54
    %v84 = vmul.f32 %v45, %v54
    %v85 = vmul.f32 %v46, %v54
    %v86 = vmul.f32 %v47, %v54
    %v87 = vmul.f32 %v48, %v54
    %vm88 = vcmask 64512
    %v89 = vsel %vm88, %v56, 0.0
    %90 = vadd.xlane.f32.xlu0 %v89
    %v91 = vpop.xlane.xlu0 %90
    %v92 = vsel %vm88, %v57, 0.0
    %93 = vadd.xlane.f32.xlu0 %v92
    %v94 = vpop.xlane.xlu0 %93
    %v95 = vsel %vm88, %v58, 0.0
    %96 = vadd.xlane.f32.xlu0 %v95
    %v97 = vpop.xlane.xlu0 %96
    %v98 = vsel %vm88, %v59, 0.0
    %99 = vadd.xlane.f32.xlu0 %v98
    %v100 = vpop.xlane.xlu0 %99
    %v101 = vsel %vm88, %v60, 0.0
    %102 = vadd.xlane.f32.xlu0 %v101
    %v103 = vpop.xlane.xlu0 %102
    %v104 = vsel %vm88, %v61, 0.0
    %105 = vadd.xlane.f32.xlu0 %v104
    %v106 = vpop.xlane.xlu0 %105
    %v107 = vsel %vm88, %v62, 0.0
    %108 = vadd.xlane.f32.xlu0 %v107
    %v109 = vpop.xlane.xlu0 %108
    %v110 = vsel %vm88, %v63, 0.0
    %111 = vadd.xlane.f32.xlu0 %v110
    %v112 = vpop.xlane.xlu0 %111
    %v113 = vsel %vm88, %v64, 0.0
    %114 = vadd.xlane.f32.xlu0 %v113
    %v115 = vpop.xlane.xlu0 %114
    %v116 = vsel %vm88, %v65, 0.0
    %117 = vadd.xlane.f32.xlu0 %v116
    %v118 = vpop.xlane.xlu0 %117
    %v119 = vsel %vm88, %v66, 0.0
    %120 = vadd.xlane.f32.xlu0 %v119
    %v121 = vpop.xlane.xlu0 %120
    %v122 = vsel %vm88, %v67, 0.0
    %123 = vadd.xlane.f32.xlu0 %v122
    %v124 = vpop.xlane.xlu0 %123
    %v125 = vsel %vm88, %v68, 0.0
    %126 = vadd.xlane.f32.xlu0 %v125
    %v127 = vpop.xlane.xlu0 %126
    %v128 = vsel %vm88, %v69, 0.0
    %129 = vadd.xlane.f32.xlu0 %v128
    %v130 = vpop.xlane.xlu0 %129
    %v131 = vsel %vm88, %v70, 0.0
    %132 = vadd.xlane.f32.xlu0 %v131
    %v133 = vpop.xlane.xlu0 %132
    %v134 = vsel %vm88, %v71, 0.0
    %135 = vadd.xlane.f32.xlu0 %v134
    %v136 = vpop.xlane.xlu0 %135
    %v137 = vsel %vm88, %v72, 0.0
    %138 = vadd.xlane.f32.xlu0 %v137
    %v139 = vpop.xlane.xlu0 %138
    %v140 = vsel %vm88, %v73, 0.0
    %141 = vadd.xlane.f32.xlu0 %v140
    %v142 = vpop.xlane.xlu0 %141
    %v143 = vsel %vm88, %v74, 0.0
    %144 = vadd.xlane.f32.xlu0 %v143
    %v145 = vpop.xlane.xlu0 %144
    %v146 = vsel %vm88, %v75, 0.0
    %147 = vadd.xlane.f32.xlu0 %v146
    %v148 = vpop.xlane.xlu0 %147
    %v149 = vsel %vm88, %v76, 0.0
    %150 = vadd.xlane.f32.xlu0 %v149
    %v151 = vpop.xlane.xlu0 %150
    %v152 = vsel %vm88, %v77, 0.0
    %153 = vadd.xlane.f32.xlu0 %v152
    %v154 = vpop.xlane.xlu0 %153
    %v155 = vsel %vm88, %v78, 0.0
    %156 = vadd.xlane.f32.xlu0 %v155
    %v157 = vpop.xlane.xlu0 %156
    %v158 = vsel %vm88, %v79, 0.0
    %159 = vadd.xlane.f32.xlu0 %v158
    %v160 = vpop.xlane.xlu0 %159
    %v161 = vsel %vm88, %v80, 0.0
    %162 = vadd.xlane.f32.xlu0 %v161
    %v163 = vpop.xlane.xlu0 %162
    %v164 = vsel %vm88, %v81, 0.0
    %165 = vadd.xlane.f32.xlu0 %v164
    %v166 = vpop.xlane.xlu0 %165
    %v167 = vsel %vm88, %v82, 0.0
    %168 = vadd.xlane.f32.xlu0 %v167
    %v169 = vpop.xlane.xlu0 %168
    %v170 = vsel %vm88, %v83, 0.0
    %171 = vadd.xlane.f32.xlu0 %v170
    %v172 = vpop.xlane.xlu0 %171
    %v173 = vsel %vm88, %v84, 0.0
    %174 = vadd.xlane.f32.xlu0 %v173
    %v175 = vpop.xlane.xlu0 %174
    %v176 = vsel %vm88, %v85, 0.0
    %177 = vadd.xlane.f32.xlu0 %v176
    %v178 = vpop.xlane.xlu0 %177
    %v179 = vsel %vm88, %v86, 0.0
    %180 = vadd.xlane.f32.xlu0 %v179
    %v181 = vpop.xlane.xlu0 %180
    %v182 = vsel %vm88, %v87, 0.0
    %183 = vadd.xlane.f32.xlu0 %v182
    %v184 = vpop.xlane.xlu0 %183
    %v185 = vld [vmem:[#allocation2] sm:$0x1]
    %s186 = vtos %v185
    %v187 = vstv %s186
    %v188 = vadd.f32 %v91, %v187
    %v189 = vadd.f32 %v94, %v187
    %v190 = vadd.f32 %v97, %v187
    %v191 = vadd.f32 %v100, %v187
    %v192 = vadd.f32 %v103, %v187
    %v193 = vadd.f32 %v106, %v187
    %v194 = vadd.f32 %v109, %v187
    %v195 = vadd.f32 %v112, %v187
    %v196 = vadd.f32 %v115, %v187
    %v197 = vadd.f32 %v118, %v187
    %v198 = vadd.f32 %v121, %v187
    %v199 = vadd.f32 %v124, %v187
    %v200 = vadd.f32 %v127, %v187
    %v201 = vadd.f32 %v130, %v187
    %v202 = vadd.f32 %v133, %v187
    %v203 = vadd.f32 %v136, %v187
    %v204 = vadd.f32 %v139, %v187
    %v205 = vadd.f32 %v142, %v187
    %v206 = vadd.f32 %v145, %v187
    %v207 = vadd.f32 %v148, %v187
    %v208 = vadd.f32 %v151, %v187
    %v209 = vadd.f32 %v154, %v187
    %v210 = vadd.f32 %v157, %v187
    %v211 = vadd.f32 %v160, %v187
    %v212 = vadd.f32 %v163, %v187
    %v213 = vadd.f32 %v166, %v187
    %v214 = vadd.f32 %v169, %v187
    %v215 = vadd.f32 %v172, %v187
    %v216 = vadd.f32 %v175, %v187
    %v217 = vadd.f32 %v178, %v187
    %v218 = vadd.f32 %v181, %v187
    %v219 = vadd.f32 %v184, %v187
    %v220 = vsub.f32 0.0, %v188
    %v221 = vsub.f32 0.0, %v189
    %v222 = vsub.f32 0.0, %v190
    %v223 = vsub.f32 0.0, %v191
    %v224 = vsub.f32 0.0, %v192
    %v225 = vsub.f32 0.0, %v193
    %v226 = vsub.f32 0.0, %v194
    %v227 = vsub.f32 0.0, %v195
    %v228 = vsub.f32 0.0, %v196
    %v229 = vsub.f32 0.0, %v197
    %v230 = vsub.f32 0.0, %v198
    %v231 = vsub.f32 0.0, %v199
    %v232 = vsub.f32 0.0, %v200
    %v233 = vsub.f32 0.0, %v201
    %v234 = vsub.f32 0.0, %v202
    %v235 = vsub.f32 0.0, %v203
    %v236 = vsub.f32 0.0, %v204
    %v237 = vsub.f32 0.0, %v205
    %v238 = vsub.f32 0.0, %v206
    %v239 = vsub.f32 0.0, %v207
    %v240 = vsub.f32 0.0, %v208
    %v241 = vsub.f32 0.0, %v209
    %v242 = vsub.f32 0.0, %v210
    %v243 = vsub.f32 0.0, %v211
    %v244 = vsub.f32 0.0, %v212
    %v245 = vsub.f32 0.0, %v213
    %v246 = vsub.f32 0.0, %v214
    %v247 = vsub.f32 0.0, %v215
    %v248 = vsub.f32 0.0, %v216
    %v249 = vsub.f32 0.0, %v217
    %v250 = vsub.f32 0.0, %v218
    %v251 = vsub.f32 0.0, %v219
    %v252 = vxor.u32 %v220, 2147483648
    %v253 = vxor.u32 %v221, 2147483648
    %v254 = vxor.u32 %v222, 2147483648
    %v255 = vxor.u32 %v223, 2147483648
    %v256 = vxor.u32 %v224, 2147483648
    %v257 = vxor.u32 %v225, 2147483648
    %v258 = vxor.u32 %v226, 2147483648
    %v259 = vxor.u32 %v227, 2147483648
    %v260 = vxor.u32 %v228, 2147483648
    %v261 = vxor.u32 %v229, 2147483648
    %v262 = vxor.u32 %v230, 2147483648
    %v263 = vxor.u32 %v231, 2147483648
    %v264 = vxor.u32 %v232, 2147483648
    %v265 = vxor.u32 %v233, 2147483648
    %v266 = vxor.u32 %v234, 2147483648
    %v267 = vxor.u32 %v235, 2147483648
    %v268 = vxor.u32 %v236, 2147483648
    %v269 = vxor.u32 %v237, 2147483648
    %v270 = vxor.u32 %v238, 2147483648
    %v271 = vxor.u32 %v239, 2147483648
    %v272 = vxor.u32 %v240, 2147483648
    %v273 = vxor.u32 %v241, 2147483648
    %v274 = vxor.u32 %v242, 2147483648
    %v275 = vxor.u32 %v243, 2147483648
    %v276 = vxor.u32 %v244, 2147483648
    %v277 = vxor.u32 %v245, 2147483648
    %v278 = vxor.u32 %v246, 2147483648
    %v279 = vxor.u32 %v247, 2147483648
    %v280 = vxor.u32 %v248, 2147483648
    %v281 = vxor.u32 %v249, 2147483648
    %v282 = vxor.u32 %v250, 2147483648
    %v283 = vxor.u32 %v251, 2147483648
    %v284 = vmul.f32 %v252, 1.442695
    %v285 = vpow.pop %v284
    %v286 = vmul.f32 %v253, 1.442695
    %v287 = vpow.pop %v286
    %v288 = vmul.f32 %v254, 1.442695
    %v289 = vpow.pop %v288
    %v290 = vmul.f32 %v255, 1.442695
    %v291 = vpow.pop %v290
    %v292 = vmul.f32 %v256, 1.442695
    %v293 = vpow.pop %v292
    %v294 = vmul.f32 %v257, 1.442695
    %v295 = vpow.pop %v294
    %v296 = vmul.f32 %v258, 1.442695
    %v297 = vpow.pop %v296
    %v298 = vmul.f32 %v259, 1.442695
    %v299 = vpow.pop %v298
    %v300 = vmul.f32 %v260, 1.442695
    %v301 = vpow.pop %v300
    %v302 = vmul.f32 %v261, 1.442695
    %v303 = vpow.pop %v302
    %v304 = vmul.f32 %v262, 1.442695
    %v305 = vpow.pop %v304
    %v306 = vmul.f32 %v263, 1.442695
    %v307 = vpow.pop %v306
    %v308 = vmul.f32 %v264, 1.442695
    %v309 = vpow.pop %v308
    %v310 = vmul.f32 %v265, 1.442695
    %v311 = vpow.pop %v310
    %v312 = vmul.f32 %v266, 1.442695
    %v313 = vpow.pop %v312
    %v314 = vmul.f32 %v267, 1.442695
    %v315 = vpow.pop %v314
    %v316 = vmul.f32 %v268, 1.442695
    %v317 = vpow.pop %v316
    %v318 = vmul.f32 %v269, 1.442695
    %v319 = vpow.pop %v318
    %v320 = vmul.f32 %v270, 1.442695
    %v321 = vpow.pop %v320
    %v322 = vmul.f32 %v271, 1.442695
    %v323 = vpow.pop %v322
    %v324 = vmul.f32 %v272, 1.442695
    %v325 = vpow.pop %v324
    %v326 = vmul.f32 %v273, 1.442695
    %v327 = vpow.pop %v326
    %v328 = vmul.f32 %v274, 1.442695
    %v329 = vpow.pop %v328
    %v330 = vmul.f32 %v275, 1.442695
    %v331 = vpow.pop %v330
    %v332 = vmul.f32 %v276, 1.442695
    %v333 = vpow.pop %v332
    %v334 = vmul.f32 %v277, 1.442695
    %v335 = vpow.pop %v334
    %v336 = vmul.f32 %v278, 1.442695
    %v337 = vpow.pop %v336
    %v338 = vmul.f32 %v279, 1.442695
    %v339 = vpow.pop %v338
    %v340 = vmul.f32 %v280, 1.442695
    %v341 = vpow.pop %v340
    %v342 = vmul.f32 %v281, 1.442695
    %v343 = vpow.pop %v342
    %v344 = vmul.f32 %v282, 1.442695
    %v345 = vpow.pop %v344
    %v346 = vmul.f32 %v283, 1.442695
    %v347 = vpow.pop %v346
    %v348 = vadd.f32 %v285, 1.0
    %v349 = vadd.f32 %v287, 1.0
    %v350 = vadd.f32 %v289, 1.0
    %v351 = vadd.f32 %v291, 1.0
    %v352 = vadd.f32 %v293, 1.0
    %v353 = vadd.f32 %v295, 1.0
    %v354 = vadd.f32 %v297, 1.0
    %v355 = vadd.f32 %v299, 1.0
    %v356 = vadd.f32 %v301, 1.0
    %v357 = vadd.f32 %v303, 1.0
    %v358 = vadd.f32 %v305, 1.0
    %v359 = vadd.f32 %v307, 1.0
    %v360 = vadd.f32 %v309, 1.0
    %v361 = vadd.f32 %v311, 1.0
    %v362 = vadd.f32 %v313, 1.0
    %v363 = vadd.f32 %v315, 1.0
    %v364 = vadd.f32 %v317, 1.0
    %v365 = vadd.f32 %v319, 1.0
    %v366 = vadd.f32 %v321, 1.0
    %v367 = vadd.f32 %v323, 1.0
    %v368 = vadd.f32 %v325, 1.0
    %v369 = vadd.f32 %v327, 1.0
    %v370 = vadd.f32 %v329, 1.0
    %v371 = vadd.f32 %v331, 1.0
    %v372 = vadd.f32 %v333, 1.0
    %v373 = vadd.f32 %v335, 1.0
    %v374 = vadd.f32 %v337, 1.0
    %v375 = vadd.f32 %v339, 1.0
    %v376 = vadd.f32 %v341, 1.0
    %v377 = vadd.f32 %v343, 1.0
    %v378 = vadd.f32 %v345, 1.0
    %v379 = vadd.f32 %v347, 1.0
    %v380 = vrcp.pop %v348
    %v381 = vmul.f32 1.0, %v380
    %v382 = vrcp.pop %v349
    %v383 = vmul.f32 1.0, %v382
    %v384 = vrcp.pop %v350
    %v385 = vmul.f32 1.0, %v384
    %v386 = vrcp.pop %v351
    %v387 = vmul.f32 1.0, %v386
    %v388 = vrcp.pop %v352
    %v389 = vmul.f32 1.0, %v388
    %v390 = vrcp.pop %v353
    %v391 = vmul.f32 1.0, %v390
    %v392 = vrcp.pop %v354
    %v393 = vmul.f32 1.0, %v392
    %v394 = vrcp.pop %v355
    %v395 = vmul.f32 1.0, %v394
    %v396 = vrcp.pop %v356
    %v397 = vmul.f32 1.0, %v396
    %v398 = vrcp.pop %v357
    %v399 = vmul.f32 1.0, %v398
    %v400 = vrcp.pop %v358
    %v401 = vmul.f32 1.0, %v400
    %v402 = vrcp.pop %v359
    %v403 = vmul.f32 1.0, %v402
    %v404 = vrcp.pop %v360
    %v405 = vmul.f32 1.0, %v404
    %v406 = vrcp.pop %v361
    %v407 = vmul.f32 1.0, %v406
    %v408 = vrcp.pop %v362
    %v409 = vmul.f32 1.0, %v408
    %v410 = vrcp.pop %v363
    %v411 = vmul.f32 1.0, %v410
    %v412 = vrcp.pop %v364
    %v413 = vmul.f32 1.0, %v412
    %v414 = vrcp.pop %v365
    %v415 = vmul.f32 1.0, %v414
    %v416 = vrcp.pop %v366
    %v417 = vmul.f32 1.0, %v416
    %v418 = vrcp.pop %v367
    %v419 = vmul.f32 1.0, %v418
    %v420 = vrcp.pop %v368
    %v421 = vmul.f32 1.0, %v420
    %v422 = vrcp.pop %v369
    %v423 = vmul.f32 1.0, %v422
    %v424 = vrcp.pop %v370
    %v425 = vmul.f32 1.0, %v424
    %v426 = vrcp.pop %v371
    %v427 = vmul.f32 1.0, %v426
    %v428 = vrcp.pop %v372
    %v429 = vmul.f32 1.0, %v428
    %v430 = vrcp.pop %v373
    %v431 = vmul.f32 1.0, %v430
    %v432 = vrcp.pop %v374
    %v433 = vmul.f32 1.0, %v432
    %v434 = vrcp.pop %v375
    %v435 = vmul.f32 1.0, %v434
    %v436 = vrcp.pop %v376
    %v437 = vmul.f32 1.0, %v436
    %v438 = vrcp.pop %v377
    %v439 = vmul.f32 1.0, %v438
    %v440 = vrcp.pop %v378
    %v441 = vmul.f32 1.0, %v440
    %v442 = vrcp.pop %v379
    %v443 = vmul.f32 1.0, %v442
    %v476 = vlaneseq
    %v477 = vand.u32 %v476, 127
    %v478 = vlaneseq
    %v479 = vshrl.u32 %v478, 7
    %v480 = vsub.s32 %v477, %v479
    %v481 = vrot.slane %v381, %v480
    %v482 = vadd.s32 %v477, 4294967288
    %v483 = vlaneseq
    %v484 = vshrl.u32 %v483, 7
    %v485 = vsub.s32 %v482, %v484
    %v486 = vrot.slane %v383, %v485
    %vm487 = vcmask 130112
    %v488 = vsel %vm487, %v486, %v481
    %v489 = vadd.s32 %v477, 4294967280
    %v490 = vlaneseq
    %v491 = vshrl.u32 %v490, 7
    %v492 = vsub.s32 %v489, %v491
    %v493 = vrot.slane %v385, %v492
    %vm494 = vcmask 195712
    %v495 = vsel %vm494, %v493, %v488
    %v496 = vadd.s32 %v477, 4294967272
    %v497 = vlaneseq
    %v498 = vshrl.u32 %v497, 7
    %v499 = vsub.s32 %v496, %v498
    %v500 = vrot.slane %v387, %v499
    %vm501 = vcmask 261312
    %v502 = vsel %vm501, %v500, %v495
    %v503 = vadd.s32 %v477, 4294967264
    %v504 = vlaneseq
    %v505 = vshrl.u32 %v504, 7
    %v506 = vsub.s32 %v503, %v505
    %v507 = vrot.slane %v389, %v506
    %vm508 = vcmask 326912
    %v509 = vsel %vm508, %v507, %v502
    %v510 = vadd.s32 %v477, 4294967256
    %v511 = vlaneseq
    %v512 = vshrl.u32 %v511, 7
    %v513 = vsub.s32 %v510, %v512
    %v514 = vrot.slane %v391, %v513
    %vm515 = vcmask 392512
    %v516 = vsel %vm515, %v514, %v509
    %v517 = vadd.s32 %v477, 4294967248
    %v518 = vlaneseq
    %v519 = vshrl.u32 %v518, 7
    %v520 = vsub.s32 %v517, %v519
    %v521 = vrot.slane %v393, %v520
    %vm522 = vcmask 458112
    %v523 = vsel %vm522, %v521, %v516
    %v524 = vadd.s32 %v477, 4294967240
    %v525 = vlaneseq
    %v526 = vshrl.u32 %v525, 7
    %v527 = vsub.s32 %v524, %v526
    %v528 = vrot.slane %v395, %v527
    %vm529 = vcmask 523712
    %v530 = vsel %vm529, %v528, %v523
    %v531 = vadd.s32 %v477, 4294967232
    %v532 = vlaneseq
    %v533 = vshrl.u32 %v532, 7
    %v534 = vsub.s32 %v531, %v533
    %v535 = vrot.slane %v397, %v534
    %vm536 = vcmask 589312
    %v537 = vsel %vm536, %v535, %v530
    %v538 = vadd.s32 %v477, 4294967224
    %v539 = vlaneseq
    %v540 = vshrl.u32 %v539, 7
    %v541 = vsub.s32 %v538, %v540
    %v542 = vrot.slane %v399, %v541
    %vm543 = vcmask 654912
    %v544 = vsel %vm543, %v542, %v537
    %v545 = vadd.s32 %v477, 4294967216
    %v546 = vlaneseq
    %v547 = vshrl.u32 %v546, 7
    %v548 = vsub.s32 %v545, %v547
    %v549 = vrot.slane %v401, %v548
    %vm550 = vcmask 720512
    %v551 = vsel %vm550, %v549, %v544
    %v552 = vadd.s32 %v477, 4294967208
    %v553 = vlaneseq
    %v554 = vshrl.u32 %v553, 7
    %v555 = vsub.s32 %v552, %v554
    %v556 = vrot.slane %v403, %v555
    %vm557 = vcmask 786112
    %v558 = vsel %vm557, %v556, %v551
    %v559 = vadd.s32 %v477, 4294967200
    %v560 = vlaneseq
    %v561 = vshrl.u32 %v560, 7
    %v562 = vsub.s32 %v559, %v561
    %v563 = vrot.slane %v405, %v562
    %vm564 = vcmask 851712
    %v565 = vsel %vm564, %v563, %v558
    %v566 = vadd.s32 %v477, 4294967192
    %v567 = vlaneseq
    %v568 = vshrl.u32 %v567, 7
    %v569 = vsub.s32 %v566, %v568
    %v570 = vrot.slane %v407, %v569
    %vm571 = vcmask 917312
    %v572 = vsel %vm571, %v570, %v565
    %v573 = vadd.s32 %v477, 4294967184
    %v574 = vlaneseq
    %v575 = vshrl.u32 %v574, 7
    %v576 = vsub.s32 %v573, %v575
    %v577 = vrot.slane %v409, %v576
    %vm578 = vcmask 982912
    %v579 = vsel %vm578, %v577, %v572
    %v580 = vadd.s32 %v477, 4294967176
    %v581 = vlaneseq
    %v582 = vshrl.u32 %v581, 7
    %v583 = vsub.s32 %v580, %v582
    %v584 = vrot.slane %v411, %v583
    %vm585 = vcmask 1048512
    %v586 = vsel %vm585, %v584, %v579
    %v587 = vlaneseq
    %v588 = vshrl.u32 %v587, 7
    %v589 = vsub.s32 %v477, %v588
    %v590 = vrot.slane %v413, %v589
    %v591 = vlaneseq
    %v592 = vshrl.u32 %v591, 7
    %v593 = vsub.s32 %v482, %v592
    %v594 = vrot.slane %v415, %v593
    %v595 = vsel %vm487, %v594, %v590
    %v596 = vlaneseq
    %v597 = vshrl.u32 %v596, 7
    %v598 = vsub.s32 %v489, %v597
    %v599 = vrot.slane %v417, %v598
    %v600 = vsel %vm494, %v599, %v595
    %v601 = vlaneseq
    %v602 = vshrl.u32 %v601, 7
    %v603 = vsub.s32 %v496, %v602
    %v604 = vrot.slane %v419, %v603
    %v605 = vsel %vm501, %v604, %v600
    %v606 = vlaneseq
    %v607 = vshrl.u32 %v606, 7
    %v608 = vsub.s32 %v503, %v607
    %v609 = vrot.slane %v421, %v608
    %v610 = vsel %vm508, %v609, %v605
    %v611 = vlaneseq
    %v612 = vshrl.u32 %v611, 7
    %v613 = vsub.s32 %v510, %v612
    %v614 = vrot.slane %v423, %v613
    %v615 = vsel %vm515, %v614, %v610
    %v616 = vlaneseq
    %v617 = vshrl.u32 %v616, 7
    %v618 = vsub.s32 %v517, %v617
    %v619 = vrot.slane %v425, %v618
    %v620 = vsel %vm522, %v619, %v615
    %v621 = vlaneseq
    %v622 = vshrl.u32 %v621, 7
    %v623 = vsub.s32 %v524, %v622
    %v624 = vrot.slane %v427, %v623
    %v625 = vsel %vm529, %v624, %v620
    %v626 = vlaneseq
    %v627 = vshrl.u32 %v626, 7
    %v628 = vsub.s32 %v531, %v627
    %v629 = vrot.slane %v429, %v628
    %v630 = vsel %vm536, %v629, %v625
    %v631 = vlaneseq
    %v632 = vshrl.u32 %v631, 7
    %v633 = vsub.s32 %v538, %v632
    %v634 = vrot.slane %v431, %v633
    %v635 = vsel %vm543, %v634, %v630
    %v636 = vlaneseq
    %v637 = vshrl.u32 %v636, 7
    %v638 = vsub.s32 %v545, %v637
    %v639 = vrot.slane %v433, %v638
    %v640 = vsel %vm550, %v639, %v635
    %v641 = vlaneseq
    %v642 = vshrl.u32 %v641, 7
    %v643 = vsub.s32 %v552, %v642
    %v644 = vrot.slane %v435, %v643
    %v645 = vsel %vm557, %v644, %v640
    %v646 = vlaneseq
    %v647 = vshrl.u32 %v646, 7
    %v648 = vsub.s32 %v559, %v647
    %v649 = vrot.slane %v437, %v648
    %v650 = vsel %vm564, %v649, %v645
    %v651 = vlaneseq
    %v652 = vshrl.u32 %v651, 7
    %v653 = vsub.s32 %v566, %v652
    %v654 = vrot.slane %v439, %v653
    %v655 = vsel %vm571, %v654, %v650
    %v656 = vlaneseq
    %v657 = vshrl.u32 %v656, 7
    %v658 = vsub.s32 %v573, %v657
    %v659 = vrot.slane %v441, %v658
    %v660 = vsel %vm578, %v659, %v655
    %v661 = vlaneseq
    %v662 = vshrl.u32 %v661, 7
    %v663 = vsub.s32 %v580, %v662
    %v664 = vrot.slane %v443, %v663
    %v665 = vsel %vm585, %v664, %v660
    %vm666 = vcmask 1041409
    %v667 = vsel %vm666, %v665, %v586
    %669 = vst [vmem:[#allocation3] sm:$0x3] %v667
    // Predicated region
    $region14: #{tpu_custom_call.1} parent=1 // pred_check
      _
    $region15: #{tpu_custom_call.1} parent=1 // pred_check_branch
      %671 = sbr.rel (0) target = $region17
    $region16: #{tpu_custom_call.1} parent=1 // pred_region
      %s673 = ssub.s32 32, 32
      %674 = vsyncadd [#allocation4], %s673
      %s676 = sshll.u32 [#allocation3], 4
      %s677 = int_to_ptr.vmem [resolvable:$true] %s676
      %679 = dma.vmem_to_hbm [thread:$0]  %s677, 32, %s3, [#allocation4]
    $region17: #{tpu_custom_call.1} parent=1 // pred_fallthru
      _
    // Predicated region
    $region18: #{tpu_custom_call.1} parent=1 // pred_check
      _
    $region19: #{tpu_custom_call.1} parent=1 // pred_check_branch
      %681 = sbr.rel (0) target = $region21
    $region20: #{tpu_custom_call.1} parent=1 // pred_region
      %682 = dma.done [#allocation4], 32
    $region21: #{tpu_custom_call.1} parent=1 // pred_fallthru
      _
    %683 = vsyncpa [#allocation4], 1

</llo_original>
